<compile_context>
chip_gen: v5e
topology: v5e:2x2
jax: 0.10.0
libtpu: 0.0.40
codegen_flags: <defaults>
</compile_context>

<pallas_src>
import functools

import jax
import jax.numpy as jnp
from jax import lax
from jax.experimental import pallas as pl
from jax.experimental.pallas import tpu as pltpu


def _round_up(x, m):
    return (x + m - 1) // m * m


def _dnn_kernel(x_ref, w1_ref, w2_ref, o_ref):
    # x_ref:  (TB, F)    current batch tile
    # w1_ref: (8, F)     Dense1 weight, native PyTorch layout (VMEM-resident)
    # w2_ref: (out, 8)   Dense2 weight, native PyTorch layout (VMEM-resident)
    # o_ref:  (out, TB)  transposed, lane-dense output tile
    x = x_ref[...]
    w1 = w1_ref[...]
    w2 = w2_ref[...]

    # Dense1: h[b, j] = sum_f x[b, f] * w1[j, f]              -> (TB, 8)
    h = lax.dot_general(
        x, w1, dimension_numbers=(((1,), (1,)), ((), ())),
        preferred_element_type=jnp.float32)
    h = jnp.maximum(h, 0.0)                                    # ReLU

    # Dense2 (transposed): z[i, b] = sum_j w2[i, j] * h[b, j] -> (out, TB)
    z = lax.dot_general(
        w2, h, dimension_numbers=(((1,), (1,)), ((), ())),
        preferred_element_type=jnp.float32)

    o_ref[...] = jax.nn.sigmoid(z).astype(o_ref.dtype)         # Sigmoid


@functools.partial(jax.jit, static_argnames=("tile_rows",))
def dnn_forward(x, w1, w2, *, tile_rows=1024):
    """x: (..., F) float32; w1: (8, F); w2: (out_size, 8) (PyTorch layouts)."""
    orig_shape = x.shape
    F = orig_shape[-1]
    out_size = w2.shape[0]

    x2 = x.reshape(-1, F).astype(jnp.float32)
    B = x2.shape[0]

    # Batch tile: multiple of 128 (batch lives on the output lane axis),
    # shrunk so the double-buffered x / output tiles stay well inside the
    # 32 MiB scoped-VMEM limit we request below (safe on v5e/v6e/v7x).
    tb = min(max(tile_rows, 128), _round_up(B, 128))
    tb = _round_up(tb, 128)
    vmem_budget = 24 * 1024 * 1024
    while tb > 128 and 4 * (2 * tb * F + 2 * out_size * tb) > vmem_budget:
        tb = max(128, _round_up(tb // 2, 128))

    grid = (pl.cdiv(B, tb),)   # ragged tail handled by Pallas boundary masking

    cost = pl.CostEstimate(
        flops=2 * B * F * 8 + 2 * B * 8 * out_size,
        transcendentals=B * out_size,
        bytes_accessed=4 * (B * F + 8 * F + out_size * 8 + out_size * B),
    )

    y_t = pl.pallas_call(
        _dnn_kernel,
        out_shape=jax.ShapeDtypeStruct((out_size, B), jnp.float32),
        grid_spec=pltpu.PrefetchScalarGridSpec(
            num_scalar_prefetch=0,
            grid=grid,
            in_specs=[
                pl.BlockSpec((tb, F), lambda i: (i, 0)),        # x batch tile
                pl.BlockSpec((8, F), lambda i: (0, 0)),         # W1 (resident)
                pl.BlockSpec((out_size, 8), lambda i: (0, 0)),  # W2 (resident)
            ],
            out_specs=pl.BlockSpec((out_size, tb), lambda i: (0, i)),
        ),
        compiler_params=pltpu.CompilerParams(
            dimension_semantics=("parallel",),
            vmem_limit_bytes=32 * 1024 * 1024,
        ),
        cost_estimate=cost,
    )(x2, w1, w2)

    if out_size == 1:                      # torch .squeeze(-1)
        return y_t[0].reshape(orig_shape[:-1])
    return y_t.T.reshape(orig_shape[:-1] + (out_size,))
    # TODO(synk): optionally cast x/W1 to bf16 at the call boundary to halve
    # the dominant HBM traffic when the accuracy budget allows.


if __name__ == "__main__":
    def ref_forward(x, w1, w2):
        y = jax.nn.sigmoid(jnp.maximum(x @ w1.T, 0.0) @ w2.T)
        return jnp.squeeze(y, axis=-1) if w2.shape[0] == 1 else y

    key = jax.random.PRNGKey(0)

    # Case 1: module defaults (out_size=1), small batch.
    B, input_size, out_size = 8, 32, 1
    kx, k1, k2 = jax.random.split(key, 3)
    x = jax.random.normal(kx, (B, input_size), dtype=jnp.float32)
    bound1 = 1.0 / jnp.sqrt(input_size)
    bound2 = 1.0 / jnp.sqrt(8.0)
    w1 = jax.random.uniform(k1, (8, input_size), jnp.float32, -bound1, bound1)
    w2 = jax.random.uniform(k2, (out_size, 8), jnp.float32, -bound2, bound2)

    y = dnn_forward(x, w1, w2)
    jax.block_until_ready(y)
    ref = ref_forward(x, w1, w2)
    assert y.shape == (B,), y.shape
    assert jnp.allclose(y, ref, atol=1e-5, rtol=1e-5)

    # Case 2: ragged batch, multi-tile grid, out_size > 1 (exercises partial
    # boundary blocks, multi-block pipelining, lane-dense transposed output).
    B2, F2, out2 = 300, 64, 3
    kx2, k12, k22 = jax.random.split(jax.random.PRNGKey(0), 3)
    x2 = jax.random.normal(kx2, (B2, F2), dtype=jnp.float32)
    b1 = 1.0 / jnp.sqrt(F2)
    w12 = jax.random.uniform(k12, (8, F2), jnp.float32, -b1, b1)
    w22 = jax.random.uniform(k22, (out2, 8), jnp.float32, -bound2, bound2)

    y2 = dnn_forward(x2, w12, w22, tile_rows=128)
    jax.block_until_ready(y2)
    ref2 = ref_forward(x2, w12, w22)
    assert y2.shape == (B2, out2), y2.shape
    assert jnp.allclose(y2, ref2, atol=1e-5, rtol=1e-5)

    # Case 3: multi-dim leading batch (nn.Linear on (..., F)), out_size=1.
    B3a, B3b, F3 = 4, 5, 32
    kx3 = jax.random.PRNGKey(3)
    x3 = jax.random.normal(kx3, (B3a, B3b, F3), dtype=jnp.float32)
    y3 = dnn_forward(x3, w1, w2)
    jax.block_until_ready(y3)
    ref3 = ref_forward(x3, w1, w2)
    assert y3.shape == (B3a, B3b), y3.shape
    assert jnp.allclose(y3, ref3, atol=1e-5, rtol=1e-5)

    print("KERNEL_OK")
</pallas_src>

<mosaic_0001>
module attributes {stable_mosaic.version = 11 : i64} {
  func.func @_dnn_kernel(%arg0: i32, %arg1: memref<128x32xf32, #tpu.memory_space<vmem>>, %arg2: memref<8x32xf32, #tpu.memory_space<vmem>>, %arg3: memref<1x8xf32, #tpu.memory_space<vmem>>, %arg4: memref<1x128xf32, #tpu.memory_space<vmem>>) attributes {dimension_semantics = [#tpu.dimension_semantics<parallel>], iteration_bounds = array<i64: 1>, scalar_prefetch = 0 : i64, scratch_operands = 0 : i64, tpu.core_type = #tpu.core_type<tc>, window_params = [{transform_indices = @transform_0, window_bounds = array<i64: 128, 32>}, {pipeline_mode = #tpu.pipeline_mode<synchronous>, transform_indices = @transform_1, window_bounds = array<i64: 8, 32>}, {pipeline_mode = #tpu.pipeline_mode<synchronous>, transform_indices = @transform_2, window_bounds = array<i64: 1, 8>}, {transform_indices = @transform_3, window_bounds = array<i64: 1, 128>}]} {
    %c0 = arith.constant 0 : index
    %c0_0 = arith.constant 0 : index
    %0 = vector.load %arg1[%c0, %c0_0] : memref<128x32xf32, #tpu.memory_space<vmem>>, vector<128x32xf32>
    %c0_1 = arith.constant 0 : index
    %c0_2 = arith.constant 0 : index
    %1 = vector.load %arg2[%c0_1, %c0_2] : memref<8x32xf32, #tpu.memory_space<vmem>>, vector<8x32xf32>
    %c0_3 = arith.constant 0 : index
    %c0_4 = arith.constant 0 : index
    %2 = vector.load %arg3[%c0_3, %c0_4] : memref<1x8xf32, #tpu.memory_space<vmem>>, vector<1x8xf32>
    %cst = arith.constant dense<0.000000e+00> : vector<128x8xf32>
    %3 = tpu.matmul %0, %1, %cst {dimension_numbers = #tpu.dot_dimension_numbers<[1], [1], [0], [0], [0, 0, 1, 0], [], []>} : vector<128x32xf32>, vector<8x32xf32>, vector<128x8xf32> -> vector<128x8xf32>
    %cst_5 = arith.constant 0.000000e+00 : f32
    %4 = vector.broadcast %cst_5 : f32 to vector<128x8xf32>
    %5 = arith.maximumf %3, %4 : vector<128x8xf32>
    %cst_6 = arith.constant dense<0.000000e+00> : vector<1x128xf32>
    %6 = tpu.matmul %2, %5, %cst_6 {dimension_numbers = #tpu.dot_dimension_numbers<[1], [1], [0], [0], [0, 0, 1, 0], [], []>} : vector<1x8xf32>, vector<128x8xf32>, vector<1x128xf32> -> vector<1x128xf32>
    %7 = arith.negf %6 : vector<1x128xf32>
    %8 = math.exp %7 : vector<1x128xf32>
    %cst_7 = arith.constant 1.000000e+00 : f32
    %9 = vector.broadcast %cst_7 : f32 to vector<1x128xf32>
    %10 = arith.addf %9, %8 : vector<1x128xf32>
    %11 = arith.divf %9, %10 : vector<1x128xf32>
    %c0_8 = arith.constant 0 : index
    %c0_9 = arith.constant 0 : index
    %12 = vector.load %arg4[%c0_8, %c0_9] : memref<1x128xf32, #tpu.memory_space<vmem>>, vector<1x128xf32>
    tpu.vector_store %arg4[%c0_8, %c0_9], %11 {strides = array<i32>} : memref<1x128xf32, #tpu.memory_space<vmem>>, vector<1x128xf32>,
    return
  }
  func.func @transform_0(%arg0: i32) -> (i32, i32) {
    %c0_i32 = arith.constant 0 : i32
    %c0_i32_0 = arith.constant 0 : i32
    return %arg0, %c0_i32 : i32, i32
  }
  func.func @transform_1(%arg0: i32) -> (i32, i32) {
    %c0_i32 = arith.constant 0 : i32
    %c0_i32_0 = arith.constant 0 : i32
    %c0_i32_1 = arith.constant 0 : i32
    return %c0_i32, %c0_i32_0 : i32, i32
  }
  func.func @transform_2(%arg0: i32) -> (i32, i32) {
    %c0_i32 = arith.constant 0 : i32
    %c0_i32_0 = arith.constant 0 : i32
    %c0_i32_1 = arith.constant 0 : i32
    return %c0_i32, %c0_i32_0 : i32, i32
  }
  func.func @transform_3(%arg0: i32) -> (i32, i32) {
    %c0_i32 = arith.constant 0 : i32
    %c0_i32_0 = arith.constant 0 : i32
    return %c0_i32, %arg0 : i32, i32
  }
}

</mosaic_0001>

<llo_original>
// kernel: dnn_forward.1
$region0: #{dnn_forward.1}
  #allocation0 [shape = 'u32[]', space=smem, size = 0x4, offset = 0x4, fixed_abs, tag = 'smem constant byte address 0x4 - core index']
  #allocation1 [shape = 'u32[72,128]{1,0:T(1,128)}', space=vmem, size = 0x9000, scoped, tag = 'internal scratch']
  %s0 = inlined_call_operand.hbm [shape: f32[8,32], index: 0, kind: input, shape index: {}]
  %s1 = inlined_call_operand.hbm [shape: f32[8,32], index: 1, kind: input, shape index: {}]
  %s2 = inlined_call_operand.vmem [shape: f32[1,8], index: 2, kind: input, shape index: {}]
  %s3 = inlined_call_operand.hbm [shape: f32[1,8], index: 3, kind: output, shape index: {}]
  %s4 = sld [smem:[#allocation0]]
  $region30: #{dnn_forward.1} parent=0
    _
  %s6 = ssub.s32 1, %s4
  %s7 = scalar_select 0, %s6, %s4
  $region1: #{dnn_forward.1} parent=0
    #allocation2 [shape = 'u8[65536]{0}', space=vmem, size = 0x10000, scoped, tag = 'input window, operand 0, single buffered']
    #allocation3 [shape = 's32[1]{0}', space=sflag, size = 0x4, scoped, tag = 'scoped memory for dnn_forward.1']
    #allocation4 [shape = 's32[1]{0}', space=sflag, size = 0x4, scoped, tag = 'scoped memory for dnn_forward.1']
    #allocation5 [shape = 'u8[4096]{0}', space=vmem, size = 0x1000, scoped, tag = 'input window, operand 1, single buffered']
    #allocation6 [shape = 's32[1]{0}', space=sflag, size = 0x4, scoped, tag = 'scoped memory for dnn_forward.1']
    #allocation7 [shape = 'u8[512]{0}', space=vmem, size = 0x400, scoped, tag = 'output window, operand 0, single buffered']
    %8 = vsyncpa [#allocation3], 0
    %9 = vsyncpa [#allocation6], 0
    %10 = vsyncpa [#allocation4], 0
    // Predicated region
    $region2: #{dnn_forward.1} parent=1 // pred_check
      _
    $region3: #{dnn_forward.1} parent=1 // pred_check_branch
      %12 = sbr.rel (0) target = $region5
    $region4: #{dnn_forward.1} parent=1 // pred_region
      %14 = vsyncadd [#allocation3], 1920
      %s15 = sshll.u32 %s0, 4
      %s16 = int_to_ptr.hbm [resolvable:$true] %s15
      %s17 = sshll.u32 [#allocation2], 4
      %s18 = int_to_ptr.vmem [resolvable:$true] %s17
      %23 = dma.hbm_to_vmem [thread:$0]  %s16, 128, %s18, [#allocation3], 128, 128, 8
    $region5: #{dnn_forward.1} parent=1 // pred_fallthru
      _
    // Predicated region
    $region6: #{dnn_forward.1} parent=1 // pred_check
      _
    $region7: #{dnn_forward.1} parent=1 // pred_check_branch
      %25 = sbr.rel (0) target = $region9
    $region8: #{dnn_forward.1} parent=1 // pred_region
      %27 = vsyncadd [#allocation6], 0
      %s29 = sshll.u32 %s1, 4
      %s30 = int_to_ptr.hbm [resolvable:$true] %s29
      %s31 = sshll.u32 [#allocation5], 4
      %s32 = int_to_ptr.vmem [resolvable:$true] %s31
      %34 = dma.hbm_to_vmem [thread:$0]  %s30, 128, %s32, [#allocation6]
    $region9: #{dnn_forward.1} parent=1 // pred_fallthru
      _
    // Predicated region
    $region10: #{dnn_forward.1} parent=1 // pred_check
      _
    $region11: #{dnn_forward.1} parent=1 // pred_check_branch
      %36 = sbr.rel (0) target = $region13
    $region12: #{dnn_forward.1} parent=1 // pred_region
      _
    $region13: #{dnn_forward.1} parent=1 // pred_fallthru
      _
    // Predicated region
    $region14: #{dnn_forward.1} parent=1 // pred_check
      _
    $region15: #{dnn_forward.1} parent=1 // pred_check_branch
      %38 = sbr.rel (0) target = $region17
    $region16: #{dnn_forward.1} parent=1 // pred_region
      %40 = dma.done [#allocation3], 2048
    $region17: #{dnn_forward.1} parent=1 // pred_fallthru
      _
    // Predicated region
    $region18: #{dnn_forward.1} parent=1 // pred_check
      _
    $region19: #{dnn_forward.1} parent=1 // pred_check_branch
      %42 = sbr.rel (0) target = $region21
    $region20: #{dnn_forward.1} parent=1 // pred_region
      %44 = dma.done [#allocation6], 128
    $region21: #{dnn_forward.1} parent=1 // pred_fallthru
      _
    %v45 = vld [vmem:[#allocation2] sm:$0xff]
    %v46 = vld [vmem:[#allocation2 + $0x8] sm:$0xff]
    %v47 = vld [vmem:[#allocation2 + $0x10] sm:$0xff]
    %v48 = vld [vmem:[#allocation2 + $0x18] sm:$0xff]
    %v49 = vld [vmem:[#allocation2 + $0x20] sm:$0xff]
    %v50 = vld [vmem:[#allocation2 + $0x28] sm:$0xff]
    %v51 = vld [vmem:[#allocation2 + $0x30] sm:$0xff]
    %v52 = vld [vmem:[#allocation2 + $0x38] sm:$0xff]
    %v53 = vld [vmem:[#allocation2 + $0x40] sm:$0xff]
    %v54 = vld [vmem:[#allocation2 + $0x48] sm:$0xff]
    %v55 = vld [vmem:[#allocation2 + $0x50] sm:$0xff]
    %v56 = vld [vmem:[#allocation2 + $0x58] sm:$0xff]
    %v57 = vld [vmem:[#allocation2 + $0x60] sm:$0xff]
    %v58 = vld [vmem:[#allocation2 + $0x68] sm:$0xff]
    %v59 = vld [vmem:[#allocation2 + $0x70] sm:$0xff]
    %v60 = vld [vmem:[#allocation2 + $0x78] sm:$0xff]
    %v61 = vld [vmem:[#allocation5] sm:$0xff]
    %v62 = vld [vmem:[%s2] sm:$0x1]
    %vm63 = vcmask 261120
    %v65 = vsel %vm63, %v45, 0
    %v68 = vsel %vm63, %v46, 0
    %v71 = vsel %vm63, %v47, 0
    %v74 = vsel %vm63, %v48, 0
    %v77 = vsel %vm63, %v49, 0
    %v80 = vsel %vm63, %v50, 0
    %v83 = vsel %vm63, %v51, 0
    %v86 = vsel %vm63, %v52, 0
    %v89 = vsel %vm63, %v53, 0
    %v92 = vsel %vm63, %v54, 0
    %v95 = vsel %vm63, %v55, 0
    %v98 = vsel %vm63, %v56, 0
    %v101 = vsel %vm63, %v57, 0
    %v104 = vsel %vm63, %v58, 0
    %v107 = vsel %vm63, %v59, 0
    %v110 = vsel %vm63, %v60, 0
    %v113 = vsel %vm63, %v61, 0
    %115 = vmatpush.xpose.msra.mxu0 0.0
    %116 = vmatpush.xpose.msra.mxu0 0.0
    %117 = vmatpush.xpose.msra.mxu0 0.0
    %118 = vmatpush.xpose.msra.mxu0 0.0
    %119 = vmatpush.xpose.msra.mxu0 0.0
    %120 = vmatpush.xpose.msra.mxu0 0.0
    %121 = vmatpush.xpose.msra.mxu0 0.0
    %122 = vmatpush.xpose.msra.mxu0 0.0
    %123 = vmatpush.xpose.msra.mxu0 0.0
    %124 = vmatpush.xpose.msra.mxu0 0.0
    %125 = vmatpush.xpose.msra.mxu0 0.0
    %126 = vmatpush.xpose.msra.mxu0 0.0
    %127 = vmatpush.xpose.msra.mxu0 0.0
    %128 = vmatpush.xpose.msra.mxu0 0.0
    %129 = vmatpush.xpose.msra.mxu0 0.0
    %130 = vmatpush.xpose.msra.mxu0 %v113
    %131 = vmatmul.f32.gmra.mxu0 %v65
    %v132 = vpop.f32.mrf.mxu0
    %v133 = vadd.f32 0.0, %v132
    %134 = vmatmul.f32.gmra.mxu0 %v68
    %v135 = vpop.f32.mrf.mxu0
    %v136 = vadd.f32 0.0, %v135
    %137 = vmatmul.f32.gmra.mxu0 %v71
    %v138 = vpop.f32.mrf.mxu0
    %v139 = vadd.f32 0.0, %v138
    %140 = vmatmul.f32.gmra.mxu0 %v74
    %v141 = vpop.f32.mrf.mxu0
    %v142 = vadd.f32 0.0, %v141
    %143 = vmatmul.f32.gmra.mxu0 %v77
    %v144 = vpop.f32.mrf.mxu0
    %v145 = vadd.f32 0.0, %v144
    %146 = vmatmul.f32.gmra.mxu0 %v80
    %v147 = vpop.f32.mrf.mxu0
    %v148 = vadd.f32 0.0, %v147
    %149 = vmatmul.f32.gmra.mxu0 %v83
    %v150 = vpop.f32.mrf.mxu0
    %v151 = vadd.f32 0.0, %v150
    %152 = vmatmul.f32.gmra.mxu0 %v86
    %v153 = vpop.f32.mrf.mxu0
    %v154 = vadd.f32 0.0, %v153
    %155 = vmatmul.f32.gmra.mxu0 %v89
    %v156 = vpop.f32.mrf.mxu0
    %v157 = vadd.f32 0.0, %v156
    %158 = vmatmul.f32.gmra.mxu0 %v92
    %v159 = vpop.f32.mrf.mxu0
    %v160 = vadd.f32 0.0, %v159
    %161 = vmatmul.f32.gmra.mxu0 %v95
    %v162 = vpop.f32.mrf.mxu0
    %v163 = vadd.f32 0.0, %v162
    %164 = vmatmul.f32.gmra.mxu0 %v98
    %v165 = vpop.f32.mrf.mxu0
    %v166 = vadd.f32 0.0, %v165
    %167 = vmatmul.f32.gmra.mxu0 %v101
    %v168 = vpop.f32.mrf.mxu0
    %v169 = vadd.f32 0.0, %v168
    %170 = vmatmul.f32.gmra.mxu0 %v104
    %v171 = vpop.f32.mrf.mxu0
    %v172 = vadd.f32 0.0, %v171
    %173 = vmatmul.f32.gmra.mxu0 %v107
    %v174 = vpop.f32.mrf.mxu0
    %v175 = vadd.f32 0.0, %v174
    %176 = vmatmul.f32.gmra.mxu0 %v110
    %v177 = vpop.f32.mrf.mxu0
    %v178 = vadd.f32 0.0, %v177
    %179 = vdwg.mxu0
    %v180 = vmax.f32 %v133, 0.0
    %v181 = vmax.f32 %v136, 0.0
    %v182 = vmax.f32 %v139, 0.0
    %v183 = vmax.f32 %v142, 0.0
    %v184 = vmax.f32 %v145, 0.0
    %v185 = vmax.f32 %v148, 0.0
    %v186 = vmax.f32 %v151, 0.0
    %v187 = vmax.f32 %v154, 0.0
    %v188 = vmax.f32 %v157, 0.0
    %v189 = vmax.f32 %v160, 0.0
    %v190 = vmax.f32 %v163, 0.0
    %v191 = vmax.f32 %v166, 0.0
    %v192 = vmax.f32 %v169, 0.0
    %v193 = vmax.f32 %v172, 0.0
    %v194 = vmax.f32 %v175, 0.0
    %v195 = vmax.f32 %v178, 0.0
    %vm196 = vcmask 64512
    %v198 = vsel %vm196, %v62, 0
    %v201 = vsel %vm196, %v180, 0
    %v204 = vsel %vm196, %v181, 0
    %v207 = vsel %vm196, %v182, 0
    %v210 = vsel %vm196, %v183, 0
    %v213 = vsel %vm196, %v184, 0
    %v216 = vsel %vm196, %v185, 0
    %v219 = vsel %vm196, %v186, 0
    %v222 = vsel %vm196, %v187, 0
    %v225 = vsel %vm196, %v188, 0
    %v228 = vsel %vm196, %v189, 0
    %v231 = vsel %vm196, %v190, 0
    %v234 = vsel %vm196, %v191, 0
    %v237 = vsel %vm196, %v192, 0
    %v240 = vsel %vm196, %v193, 0
    %v243 = vsel %vm196, %v194, 0
    %v246 = vsel %vm196, %v195, 0
    %248 = vmatpush.xpose.msra.mxu0 %v246
    %249 = vmatpush.xpose.msra.mxu0 %v243
    %250 = vmatpush.xpose.msra.mxu0 %v240
    %251 = vmatpush.xpose.msra.mxu0 %v237
    %252 = vmatpush.xpose.msra.mxu0 %v234
    %253 = vmatpush.xpose.msra.mxu0 %v231
    %254 = vmatpush.xpose.msra.mxu0 %v228
    %255 = vmatpush.xpose.msra.mxu0 %v225
    %256 = vmatpush.xpose.msra.mxu0 %v222
    %257 = vmatpush.xpose.msra.mxu0 %v219
    %258 = vmatpush.xpose.msra.mxu0 %v216
    %259 = vmatpush.xpose.msra.mxu0 %v213
    %260 = vmatpush.xpose.msra.mxu0 %v210
    %261 = vmatpush.xpose.msra.mxu0 %v207
    %262 = vmatpush.xpose.msra.mxu0 %v204
    %263 = vmatpush.xpose.msra.mxu0 %v201
    %264 = vmatmul.f32.gmra.mxu0 %v198
    %v265 = vpop.f32.mrf.mxu0
    %v266 = vadd.f32 0.0, %v265
    %267 = vdwg.mxu0
    %v268 = vxor.u32 %v266, 2147483648
    %v269 = vmul.f32 %v268, 1.442695
    %v270 = vpow.pop %v269
    %v271 = vadd.f32 %v270, 1.0
    %v272 = vrcp.pop %v271
    %v273 = vmul.f32 %v271, %v272
    %v274 = vsub.f32 1.0, %v273
    %v275 = vmul.f32 %v272, %v274
    %v276 = vadd.f32 %v272, %v275
    %vm277 = vweird.f32 %v271
    %vm278 = vweird.f32 %v272
    %vm279 = vmor %vm277, %vm278
    %v280 = vsel %vm279, %v272, %v276
    %v281 = vand.u32 2147483647, %v271
    %vm282 = vcmp.eq.f32.partialorder %v281, 8.507059e+37
    %v283 = vand.u32 %v271, 2147483648
    %v284 = vor.u32 1.1754944e-38, %v283
    %v285 = vsel %vm282, %v284, %v280
    %v286 = vmul.f32 1.0, %v285
    %287 = vst [vmem:[#allocation7] sm:$0x1] %v286
    // Predicated region
    $region22: #{dnn_forward.1} parent=1 // pred_check
      _
    $region23: #{dnn_forward.1} parent=1 // pred_check_branch
      %289 = sbr.rel (0) target = $region25
    $region24: #{dnn_forward.1} parent=1 // pred_region
      %291 = vsyncadd [#allocation4], 0
      %s293 = sshll.u32 [#allocation7], 4
      %s294 = int_to_ptr.vmem [resolvable:$true] %s293
      %s295 = sshll.u32 %s3, 4
      %s296 = int_to_ptr.hbm [resolvable:$true] %s295
      %298 = dma.vmem_to_hbm [thread:$0]  %s294, 16, %s296, [#allocation4]
    $region25: #{dnn_forward.1} parent=1 // pred_fallthru
      _
    // Predicated region
    $region26: #{dnn_forward.1} parent=1 // pred_check
      _
    $region27: #{dnn_forward.1} parent=1 // pred_check_branch
      %300 = sbr.rel (0) target = $region29
    $region28: #{dnn_forward.1} parent=1 // pred_region
      %302 = dma.done [#allocation4], 16
    $region29: #{dnn_forward.1} parent=1 // pred_fallthru
      _
    %303 = vsyncpa [#allocation3], 1
    %304 = vsyncpa [#allocation6], 1
    %305 = vsyncpa [#allocation4], 1

</llo_original>
